<compile_context>
chip_gen: v7x
topology: tpu7x:2x2x1
jax: 0.10.0
libtpu: 0.0.40
codegen_flags: <defaults>
</compile_context>

<pallas_src>
import functools

import jax
import jax.numpy as jnp
from jax.experimental import pallas as pl
from jax.experimental.pallas import tpu as pltpu

_LANES = 128
_SUBLANES = 32  # lcm of f32(8) / bf16(16) / int8(32) sublane packing


def _round_up(x, m):
    return (x + m - 1) // m * m


def _physical_vmem_bytes():
    try:
        return int(getattr(pltpu.get_tpu_info(), "vmem_capacity_bytes"))
    except Exception:
        return 64 << 20  # assume the smallest (v7x per-TC VMEM)


# --------------------------- kernels ---------------------------


def _mse_len_kernel(pred_ref, true_ref, len_ref, out_ref, acc_ref, *,
                    tb, b_total, inv_b, divide):
    """Length-prefix-mask fast path: mask derived in-kernel from seq_length."""
    c = pl.program_id(0)
    j = pl.program_id(1)
    g = pl.num_programs(1)

    @pl.when(j == 0)
    def _():
        acc_ref[...] = jnp.zeros_like(acc_ref)

    # Global row indices of this block; mask out the ragged (out-of-bounds) tail rows.
    row0 = (c * g + j) * tb
    rows = jax.lax.broadcasted_iota(jnp.int32, (tb, 1), 0) + row0
    row_ok = rows < b_total
    cols = jax.lax.broadcasted_iota(jnp.int32, pred_ref.shape, 1).astype(jnp.float32)

    L = len_ref[...]                                   # (tb, 1) f32 seq lengths
    valid = (cols < L) & row_ok                        # length-prefix mask

    p = pred_ref[...].astype(jnp.float32)
    t = true_ref[...].astype(jnp.float32)
    d = p - t
    d2 = jnp.where(valid, d * d, 0.0)                  # NaN-safe masking (matches torch)

    if divide:
        w = inv_b / jnp.maximum(L, 1.0)                # 1 / (B * clamp(seq_len, 1))
    else:
        w = jnp.full_like(L, inv_b)                    # 1 / B
    w = jnp.where(row_ok, w, 0.0)                      # garbage OOB rows contribute 0

    acc_ref[...] += jnp.sum(d2 * w)

    @pl.when(j == pl.num_programs(1) - 1)
    def _():
        out_ref[0] = acc_ref[...]


def _mse_mask_kernel(pred_ref, true_ref, mask_ref, w_ref, out_ref, acc_ref, *,
                     tb, b_total):
    """Fallback path: arbitrary explicit [B, S] mask streamed from HBM."""
    c = pl.program_id(0)
    j = pl.program_id(1)
    g = pl.num_programs(1)

    @pl.when(j == 0)
    def _():
        acc_ref[...] = jnp.zeros_like(acc_ref)

    row0 = (c * g + j) * tb
    rows = jax.lax.broadcasted_iota(jnp.int32, (tb, 1), 0) + row0
    row_ok = rows < b_total

    valid = (mask_ref[...] != 0) & row_ok

    p = pred_ref[...].astype(jnp.float32)
    t = true_ref[...].astype(jnp.float32)
    d = p - t
    d2 = jnp.where(valid, d * d, 0.0)

    # Per-row weight already holds 1/(B * clamp(seq_len, 1)) (or 1/B if sum_losses).
    w = jnp.where(row_ok, w_ref[...], 0.0)

    acc_ref[...] += jnp.sum(d2 * w)

    @pl.when(j == pl.num_programs(1) - 1)
    def _():
        out_ref[0] = acc_ref[...]


# --------------------------- wrapper ---------------------------


def mse_loss(pred_los, true_los, mask, seq_length, *, sum_losses=False,
             length_prefix_mask=False, block_rows=None):
    """Pallas TPU implementation of the masked MSE loss.

    pred_los, true_los: [B, S] float (any float dtype; bf16 recommended)
    mask:               [B, S] bool/int, or None when length_prefix_mask=True
    seq_length:         [B] int / float
    length_prefix_mask: if True (or mask is None), assume mask == (col < seq_length)
                        and rebuild it in-kernel (no mask HBM stream).
    returns scalar float32
    """
    assert pred_los.shape == true_los.shape
    B, S = pred_los.shape
    use_len_path = length_prefix_mask or (mask is None)
    if not use_len_path:
        assert mask.shape == (B, S)

    in_itemsize = pred_los.dtype.itemsize + true_los.dtype.itemsize
    if not use_len_path:
        in_itemsize += 1  # int8 mask stream

    # ---- row tiling (no padding of the big operands; ragged tail masked in-kernel) ----
    phys_vmem = _physical_vmem_bytes()
    budget = (4 << 20) if phys_vmem >= (96 << 20) else (2 << 20)  # per-block HBM bytes
    bytes_per_row = S * in_itemsize + 4

    if block_rows is not None:
        tb = int(min(block_rows, B))
    else:
        tb = max(_SUBLANES, (budget // max(bytes_per_row, 1)) // _SUBLANES * _SUBLANES)
        if tb >= B:
            tb = B  # full-dim block: legal for any (unaligned) B
    n_blocks = pl.cdiv(B, tb)

    # Megacore split (v7x): only when both grid halves carry real row blocks.
    if block_rows is None and n_blocks > 1 and n_blocks % 2 == 1:
        tb_alt = _round_up(pl.cdiv(B, n_blocks + 1), _SUBLANES)
        if tb_alt < B and pl.cdiv(B, tb_alt) % 2 == 0:
            tb = tb_alt
            n_blocks = pl.cdiv(B, tb)
    num_cores = 2 if (n_blocks >= 2 and n_blocks % 2 == 0) else 1
    g = n_blocks // num_cores

    # ---- VMEM plan: double-buffered inputs + f32 in-kernel temporaries, <75% of v7x ----
    block_in_bytes = tb * S * in_itemsize + tb * _LANES * 4
    block_f32_bytes = tb * S * 4
    est = 2 * block_in_bytes + 6 * block_f32_bytes + (2 << 20)
    vmem_limit = int(min(48 << 20, max(32 << 20, est)))

    def in_map(c, j):
        return (c * g + j, 0)

    row_spec = pl.BlockSpec((tb, S), in_map)   # full last dim: no lane padding needed
    col_spec = pl.BlockSpec((tb, 1), in_map)
    out_spec = pl.BlockSpec((1, 1, 1), lambda c, j: (c, 0, 0))

    if use_len_path:
        kernel = functools.partial(_mse_len_kernel, tb=tb, b_total=B,
                                   inv_b=1.0 / B, divide=not sum_losses)
        in_specs = [row_spec, row_spec, col_spec]
        args = (pred_los, true_los,
                seq_length.astype(jnp.float32).reshape(B, 1))
    else:
        # Fallback path only: the bool->int8 cast is one extra elementwise pass; the
        # length-prefix path avoids the mask stream (and this cast) entirely.
        m = mask if mask.dtype == jnp.int8 else mask.astype(jnp.int8)
        if sum_losses:
            w = jnp.full((B, 1), 1.0 / B, dtype=jnp.float32)
        else:
            w = ((1.0 / B) /
                 jnp.maximum(seq_length.astype(jnp.float32), 1.0)).reshape(B, 1)
        kernel = functools.partial(_mse_mask_kernel, tb=tb, b_total=B)
        in_specs = [row_spec, row_spec, row_spec, col_spec]
        args = (pred_los, true_los, m, w)

    grid_spec = pltpu.PrefetchScalarGridSpec(
        num_scalar_prefetch=0,
        grid=(num_cores, g),
        in_specs=in_specs,
        out_specs=out_spec,
        scratch_shapes=[pltpu.VMEM((1, 1), jnp.float32)],
    )

    partials = pl.pallas_call(
        kernel,
        out_shape=jax.ShapeDtypeStruct((num_cores, 1, 1), jnp.float32),
        grid_spec=grid_spec,
        compiler_params=pltpu.CompilerParams(
            dimension_semantics=("parallel", "arbitrary"),
            vmem_limit_bytes=vmem_limit,
        ),
    )(*args)

    return jnp.sum(partials)  # combine the per-core partial sums


# --------------------------- reference & demo ---------------------------


def _reference(pred, true, mask, seq_length, sum_losses=False):
    m = mask.astype(bool)
    p = jnp.where(m, pred, 0).astype(jnp.float32)
    t = jnp.where(m, true, 0).astype(jnp.float32)
    loss = jnp.sum((p - t) ** 2, axis=-1)
    if not sum_losses:
        loss = loss / jnp.maximum(seq_length.astype(jnp.float32), 1.0)
    return jnp.mean(loss)


if __name__ == "__main__":
    key = jax.random.PRNGKey(0)

    def make_inputs(k, B, S, dtype):
        k1, k2, k3, k4 = jax.random.split(k, 4)
        pred = jax.random.normal(k1, (B, S), dtype=dtype)
        true = jax.random.normal(k2, (B, S), dtype=dtype)
        seq_len = jax.random.randint(k3, (B,), 0, S + 1, dtype=jnp.int32)
        prefix_mask = jnp.arange(S, dtype=jnp.int32)[None, :] < seq_len[:, None]
        rand_mask = jax.random.bernoulli(k4, 0.7, (B, S))
        return pred, true, seq_len, prefix_mask, rand_mask

    configs = [
        # (dtype, B, S, block_rows)
        (jnp.float32, 8, 128, None),    # aligned shapes, single full-dim block
        (jnp.bfloat16, 5, 100, None),   # unaligned shapes + low-precision inputs
        (jnp.float32, 70, 128, 32),     # multi-block with ragged tail (odd -> 1 group)
        (jnp.float32, 64, 128, 16),     # even block count -> 2-way megacore grid
    ]
    for dtype, B, S, br in configs:
        pred, true, seq_len, prefix_mask, rand_mask = make_inputs(
            jax.random.fold_in(key, B * 1000 + S), B, S, dtype)

        for sum_losses in (False, True):
            # Fast path: the usual length-prefix mask, rebuilt in-kernel (no mask stream).
            out = mse_loss(pred, true, None, seq_len, sum_losses=sum_losses,
                           length_prefix_mask=True, block_rows=br)
            out = jax.block_until_ready(out)
            ref = _reference(pred, true, prefix_mask, seq_len, sum_losses=sum_losses)
            assert jnp.allclose(out, ref, rtol=1e-4, atol=1e-5), (
                "len-path", dtype, B, S, sum_losses, out, ref)

            # General path: arbitrary explicit mask (faithful to the torch module).
            out = mse_loss(pred, true, rand_mask, seq_len, sum_losses=sum_losses,
                           block_rows=br)
            out = jax.block_until_ready(out)
            ref = _reference(pred, true, rand_mask, seq_len, sum_losses=sum_losses)
            assert jnp.allclose(out, ref, rtol=1e-4, atol=1e-5), (
                "mask-path", dtype, B, S, sum_losses, out, ref)

    print("KERNEL_OK")
</pallas_src>

<mosaic_0001>
module attributes {stable_mosaic.version = 11 : i64} {
  func.func @_mse_len_kernel(%arg0: i32, %arg1: i32, %arg2: memref<8x128xf32, #tpu.memory_space<vmem>>, %arg3: memref<8x128xf32, #tpu.memory_space<vmem>>, %arg4: memref<8x1xf32, #tpu.memory_space<vmem>>, %arg5: memref<1x1x1xf32, #tpu.memory_space<vmem>>, %arg6: memref<1x1xf32, #tpu.memory_space<vmem>>) attributes {dimension_semantics = [#tpu.dimension_semantics<parallel>, #tpu.dimension_semantics<arbitrary>], iteration_bounds = array<i64: 1, 1>, scalar_prefetch = 0 : i64, scratch_operands = 1 : i64, tpu.core_type = #tpu.core_type<tc>, window_params = [{transform_indices = @transform_0, window_bounds = array<i64: 8, 128>}, {transform_indices = @transform_1, window_bounds = array<i64: 8, 128>}, {transform_indices = @transform_2, window_bounds = array<i64: 8, 1>}, {transform_indices = @transform_3, window_bounds = array<i64: 1, 1, 1>}]} {
    %c0_i32 = arith.constant 0 : i32
    %0 = arith.cmpi eq, %arg1, %c0_i32 : i32
    %1 = arith.extui %0 : i1 to i32
    %c0_i32_0 = arith.constant 0 : i32
    %2 = arith.cmpi ne, %1, %c0_i32_0 : i32
    scf.if %2 {
      %cst_17 = arith.constant 0.000000e+00 : f32
      %43 = vector.broadcast %cst_17 : f32 to vector<1x1xf32>
      %c0_18 = arith.constant 0 : index
      %c0_19 = arith.constant 0 : index
      %44 = vector.load %arg6[%c0_18, %c0_19] : memref<1x1xf32, #tpu.memory_space<vmem>>, vector<1x1xf32>
      tpu.vector_store %arg6[%c0_18, %c0_19], %43 {strides = array<i32>} : memref<1x1xf32, #tpu.memory_space<vmem>>, vector<1x1xf32>,
    } else {
    }
    %c1_i32 = arith.constant 1 : i32
    %3 = arith.muli %arg0, %c1_i32 : i32
    %4 = arith.addi %3, %arg1 : i32
    %c8_i32 = arith.constant 8 : i32
    %5 = arith.muli %4, %c8_i32 : i32
    %6 = tpu.iota {dimensions = array<i32: 0>} : vector<8x1xi32>
    %7 = vector.broadcast %5 : i32 to vector<8x1xi32>
    %8 = arith.addi %6, %7 : vector<8x1xi32>
    %c8_i32_1 = arith.constant 8 : i32
    %9 = vector.broadcast %c8_i32_1 : i32 to vector<8x1xi32>
    %10 = arith.cmpi slt, %8, %9 : vector<8x1xi32>
    %11 = tpu.iota {dimensions = array<i32: 1>} : vector<8x128xi32>
    %12 = arith.sitofp %11 : vector<8x128xi32> to vector<8x128xf32>
    %c0 = arith.constant 0 : index
    %c0_2 = arith.constant 0 : index
    %13 = vector.load %arg4[%c0, %c0_2] : memref<8x1xf32, #tpu.memory_space<vmem>>, vector<8x1xf32>
    %14 = vector.broadcast %13 : vector<8x1xf32> to vector<8x128xf32>
    %15 = arith.cmpf olt, %12, %14 : vector<8x128xf32>
    %16 = vector.broadcast %10 : vector<8x1xi1> to vector<8x128xi1>
    %17 = arith.andi %15, %16 : vector<8x128xi1>
    %c0_3 = arith.constant 0 : index
    %c0_4 = arith.constant 0 : index
    %18 = vector.load %arg2[%c0_3, %c0_4] : memref<8x128xf32, #tpu.memory_space<vmem>>, vector<8x128xf32>
    %c0_5 = arith.constant 0 : index
    %c0_6 = arith.constant 0 : index
    %19 = vector.load %arg3[%c0_5, %c0_6] : memref<8x128xf32, #tpu.memory_space<vmem>>, vector<8x128xf32>
    %20 = arith.subf %18, %19 : vector<8x128xf32>
    %21 = arith.mulf %20, %20 : vector<8x128xf32>
    %cst = arith.constant 0.000000e+00 : f32
    %22 = vector.broadcast %cst : f32 to vector<8x128xf32>
    %23 = arith.select %17, %21, %22 : vector<8x128xi1>, vector<8x128xf32>
    %cst_7 = arith.constant 1.000000e+00 : f32
    %24 = vector.broadcast %cst_7 : f32 to vector<8x1xf32>
    %25 = arith.maximumf %13, %24 : vector<8x1xf32>
    %cst_8 = arith.constant 1.250000e-01 : f32
    %26 = vector.broadcast %cst_8 : f32 to vector<8x1xf32>
    %27 = arith.divf %26, %25 : vector<8x1xf32>
    %cst_9 = arith.constant 0.000000e+00 : f32
    %28 = vector.broadcast %cst_9 : f32 to vector<8x1xf32>
    %29 = arith.select %10, %27, %28 : vector<8x1xi1>, vector<8x1xf32>
    %c0_10 = arith.constant 0 : index
    %c0_11 = arith.constant 0 : index
    %30 = vector.load %arg6[%c0_10, %c0_11] : memref<1x1xf32, #tpu.memory_space<vmem>>, vector<1x1xf32>
    %31 = vector.broadcast %29 : vector<8x1xf32> to vector<8x128xf32>
    %32 = arith.mulf %23, %31 : vector<8x128xf32>
    %33 = vector.shape_cast %32 : vector<8x128xf32> to vector<1x8x128xf32>
    %cst_12 = arith.constant dense<0.000000e+00> : vector<1xf32>
    %34 = vector.multi_reduction <add>, %33, %cst_12 [1, 2] : vector<1x8x128xf32> to vector<1xf32>
    %35 = vector.shape_cast %34 : vector<1xf32> to vector<1x1x1xf32>
    %36 = vector.extract %35[0, 0, 0] : f32 from vector<1x1x1xf32>
    %37 = vector.broadcast %36 : f32 to vector<1x1xf32>
    %38 = arith.addf %30, %37 : vector<1x1xf32>
    %c0_13 = arith.constant 0 : index
    %c0_14 = arith.constant 0 : index
    %39 = vector.load %arg6[%c0_13, %c0_14] : memref<1x1xf32, #tpu.memory_space<vmem>>, vector<1x1xf32>
    tpu.vector_store %arg6[%c0_13, %c0_14], %38 {strides = array<i32>} : memref<1x1xf32, #tpu.memory_space<vmem>>, vector<1x1xf32>,
    %c0_i32_15 = arith.constant 0 : i32
    %40 = arith.cmpi eq, %arg1, %c0_i32_15 : i32
    %41 = arith.extui %40 : i1 to i32
    %c0_i32_16 = arith.constant 0 : i32
    %42 = arith.cmpi ne, %41, %c0_i32_16 : i32
    scf.if %42 {
      %c0_17 = arith.constant 0 : index
      %c0_18 = arith.constant 0 : index
      %43 = vector.load %arg6[%c0_17, %c0_18] : memref<1x1xf32, #tpu.memory_space<vmem>>, vector<1x1xf32>
      %c0_19 = arith.constant 0 : index
      %c0_20 = arith.constant 0 : index
      %c0_21 = arith.constant 0 : index
      %44 = vector.load %arg5[%c0_19, %c0_20, %c0_21] : memref<1x1x1xf32, #tpu.memory_space<vmem>>, vector<1x1x1xf32>
      %45 = vector.shape_cast %44 : vector<1x1x1xf32> to vector<1x1xf32>
      %46 = vector.shape_cast %43 : vector<1x1xf32> to vector<1x1x1xf32>
      tpu.vector_store %arg5[%c0_19, %c0_20, %c0_21], %46 {strides = array<i32>} : memref<1x1x1xf32, #tpu.memory_space<vmem>>, vector<1x1x1xf32>,
    } else {
    }
    return
  }
  func.func @transform_0(%arg0: i32, %arg1: i32) -> (i32, i32) {
    %c1_i32 = arith.constant 1 : i32
    %0 = arith.muli %arg0, %c1_i32 : i32
    %1 = arith.addi %0, %arg1 : i32
    %c0_i32 = arith.constant 0 : i32
    %c0_i32_0 = arith.constant 0 : i32
    return %1, %c0_i32 : i32, i32
  }
  func.func @transform_1(%arg0: i32, %arg1: i32) -> (i32, i32) {
    %c1_i32 = arith.constant 1 : i32
    %0 = arith.muli %arg0, %c1_i32 : i32
    %1 = arith.addi %0, %arg1 : i32
    %c0_i32 = arith.constant 0 : i32
    %c0_i32_0 = arith.constant 0 : i32
    return %1, %c0_i32 : i32, i32
  }
  func.func @transform_2(%arg0: i32, %arg1: i32) -> (i32, i32) {
    %c1_i32 = arith.constant 1 : i32
    %0 = arith.muli %arg0, %c1_i32 : i32
    %1 = arith.addi %0, %arg1 : i32
    %c0_i32 = arith.constant 0 : i32
    %c0_i32_0 = arith.constant 0 : i32
    return %1, %c0_i32 : i32, i32
  }
  func.func @transform_3(%arg0: i32, %arg1: i32) -> (i32, i32, i32) {
    %c0_i32 = arith.constant 0 : i32
    %c0_i32_0 = arith.constant 0 : i32
    %c0_i32_1 = arith.constant 0 : i32
    return %arg0, %c0_i32, %c0_i32_0 : i32, i32, i32
  }
}

</mosaic_0001>

<llo_original>
// kernel: tpu_custom_call.1
$region0: #{tpu_custom_call.1}
  #allocation0 [shape = 'u32[]', space=smem, size = 0x4, offset = 0x4, fixed_abs, tag = 'smem constant byte address 0x4 - core index']
  #allocation1 [shape = 'u32[144,128]{1,0:T(1,128)}', space=vmem, size = 0x12000, scoped, tag = 'internal scratch']
  #allocation2 [shape = 'f32[1,1]{1,0:T(1,128)}', space=vmem, size = 0x200, scoped, tag = 'scratch operand']
  %s0 = inlined_call_operand.vmem [shape: f32[8,128], index: 0, kind: input, shape index: {}]
  %s1 = inlined_call_operand.hbm [shape: f32[8,128], index: 1, kind: input, shape index: {}]
  %s2 = inlined_call_operand.vmem [shape: f32[8,1], index: 2, kind: input, shape index: {}]
  %s3 = inlined_call_operand.hbm [shape: f32[1,1,1], index: 3, kind: output, shape index: {}]
  %s4 = sld [smem:[#allocation0]]
  $region34: #{tpu_custom_call.1} parent=0
    _
  %s6 = ssub.s32 1, %s4
  %s7 = scalar_select 0, %s6, %s4
  $region1: #{tpu_custom_call.1} parent=0
    #allocation3 [shape = 'u8[4096]{0}', space=vmem, size = 0x1000, scoped, tag = 'input window, operand 1, single buffered']
    #allocation4 [shape = 's32[1]{0}', space=sflag, size = 0x4, scoped, tag = 'scoped memory for tpu_custom_call.1']
    #allocation5 [shape = 's32[1]{0}', space=sflag, size = 0x4, scoped, tag = 'scoped memory for tpu_custom_call.1']
    #allocation6 [shape = 'u8[512]{0}', space=vmem, size = 0x400, scoped, tag = 'output window, operand 0, single buffered']
    %8 = vsyncpa [#allocation4], 0
    %9 = vsyncpa [#allocation5], 0
    // Predicated region
    $region2: #{tpu_custom_call.1} parent=1 // pred_check
      _
    $region3: #{tpu_custom_call.1} parent=1 // pred_check_branch
      %11 = sbr.rel (0) target = $region5
    $region4: #{tpu_custom_call.1} parent=1 // pred_region
      %s12 = sadd.s32 0, 0
      %p13 = scmp.lt.s32.totalorder %s12, 0
      %s14 = scalar_select %p13, %s12, 0
      %s15 = smul.addr %s14, 8
      %s16 = scalar_lea.vmem %s0, %s15
      %s17 = sadd.s32 0, 0
    $region5: #{tpu_custom_call.1} parent=1 // pred_fallthru
      _
    // Predicated region
    $region6: #{tpu_custom_call.1} parent=1 // pred_check
      _
    $region7: #{tpu_custom_call.1} parent=1 // pred_check_branch
      %19 = sbr.rel (0) target = $region9
    $region8: #{tpu_custom_call.1} parent=1 // pred_region
      %s20 = sadd.s32 0, 0
      %s22 = ssub.s32 128, 128
      %23 = vsyncadd [#allocation4], %s22
      %s24 = smul.addr %s20, 128
      %s25 = scalar_lea.hbm %s1, %s24
      %s27 = sshll.u32 [#allocation3], 4
      %s28 = int_to_ptr.vmem [resolvable:$true] %s27
      %30 = dma.hbm_to_vmem [thread:$0]  %s25, 128, %s28, [#allocation4]
    $region9: #{tpu_custom_call.1} parent=1 // pred_fallthru
      _
    // Predicated region
    $region10: #{tpu_custom_call.1} parent=1 // pred_check
      _
    $region11: #{tpu_custom_call.1} parent=1 // pred_check_branch
      %32 = sbr.rel (0) target = $region13
    $region12: #{tpu_custom_call.1} parent=1 // pred_region
      %s33 = sadd.s32 0, 0
      %p34 = scmp.lt.s32.totalorder %s33, 0
      %s35 = scalar_select %p34, %s33, 0
      %s36 = smul.addr %s35, 8
      %s37 = scalar_lea.vmem %s2, %s36
      %s38 = sadd.s32 0, 0
    $region13: #{tpu_custom_call.1} parent=1 // pred_fallthru
      _
    // Predicated region
    $region14: #{tpu_custom_call.1} parent=1 // pred_check
      _
    $region15: #{tpu_custom_call.1} parent=1 // pred_check_branch
      %40 = sbr.rel (0) target = $region17
    $region16: #{tpu_custom_call.1} parent=1 // pred_region
      %41 = dma.done [#allocation4], 128
    $region17: #{tpu_custom_call.1} parent=1 // pred_fallthru
      _
    %s42 = sadd.s32 0, 0
    %p43 = scmp.lt.s32.totalorder %s42, 0
    %s44 = scalar_select %p43, %s42, 0
    %s45 = smul.addr %s44, 8
    %s46 = scalar_lea.vmem %s0, %s45
    %s47 = sadd.s32 0, 0
    %p48 = scmp.lt.s32.totalorder %s47, 0
    %s49 = scalar_select %p48, %s47, 0
    %s50 = smul.addr %s49, 8
    %s51 = scalar_lea.vmem %s2, %s50
    %s52 = sadd.s32 0, 0
    %p53 = scmp.lt.s32.totalorder %s52, 0
    %s54 = scalar_select %p53, %s52, 0
    %s55 = smul.addr %s54, 8
    %s56 = scalar_lea.vmem %s0, %s55
    %s57 = sadd.s32 0, 0
    %s58 = sadd.s32 0, 0
    %s59 = sadd.s32 0, 0
    %p60 = scmp.lt.s32.totalorder %s59, 0
    %s61 = scalar_select %p60, %s59, 0
    %s62 = smul.addr %s61, 8
    %s63 = scalar_lea.vmem %s2, %s62
    %s64 = sadd.s32 0, 0
    %p65 = scmp.eq.s32.totalorder 0, 0
    // Predicated region
    $region18: #{tpu_custom_call.1} parent=1 // pred_check
      %p66 = pneg %p65
    $region19: #{tpu_custom_call.1} parent=1 // pred_check_branch
      %68 = sbr.rel (%p66) target = $region21
    $region20: #{tpu_custom_call.1} parent=1 // pred_region
      %vm69 = vcmask 0
      %70 = vst.msk [vmem:[#allocation2] sm:$0x1] %vm69, 0.0
    $region21: #{tpu_custom_call.1} parent=1 // pred_fallthru
      _
    %s71 = sadd.s32 0, 0
    %s72 = smul.u32 %s71, 8
    %v73 = vlaneseq
    %v74 = vshrl.u32 %v73, 7
    %v75 = vstv %s72
    %v76 = vadd.s32 %v74, %v75
    %vm77 = vcmp.lt.s32.totalorder %v76, 8
    %v78 = vlaneseq
    %v79 = vand.u32 %v78, 127
    %v80 = vcvt.s32.f32 %v79
    %v81 = vld [vmem:[%s63] sm:$0xff]
    %83 = vset.pattern.permute.xlu0 0
    %84 = vperm.xlu0 %83, %v81
    %v85 = vpop.permute.xlu0 %84
    %vm87 = vcmp.lt.f32.partialorder %v80, %v85
    %v88 = vsel %vm77, 1, 0
    %vm89 = vcmp.eq.s32.totalorder %v88, 1
    %vm90 = vmand %vm87, %vm89
    %v91 = vld [vmem:[%s56] sm:$0xff]
    %v92 = vld [vmem:[#allocation3] sm:$0xff]
    %v93 = vsub.f32 %v91, %v92
    %v94 = vmul.f32 %v93, %v93
    %v95 = vsel %vm90, %v94, 0.0
    %v96 = vmax.f32 %v81, 1.0
    %v97 = vrcp.pop %v96
    %v98 = vmul.f32 0.125, %v97
    %v99 = vsel %vm77, %v98, 0.0
    %v100 = vld [vmem:[#allocation2] sm:$0x1]
    %102 = vset.pattern.permute.xlu0 0
    %103 = vperm.xlu0 %102, %v99
    %v104 = vpop.permute.xlu0 %103
    %v106 = vmul.f32 %v95, %v104
    %107 = vadd.xlane.f32.xlu0 %v106
    %v108 = vpop.xlane.xlu0 %107
    %v109 = vrot.slane %v108, 4
    %v110 = vadd.f32 %v108, %v109
    %v111 = vrot.slane %v110, 2
    %v112 = vadd.f32 %v110, %v111
    %v113 = vrot.slane %v112, 1
    %v114 = vadd.f32 %v112, %v113
    %s115 = vtos %v114
    %v116 = vstv %s115
    %v117 = vadd.f32 %v100, %v116
    %vm118 = vcmask 0
    %119 = vst.msk [vmem:[#allocation2] sm:$0x1] %vm118, %v117
    // Predicated region
    $region22: #{tpu_custom_call.1} parent=1 // pred_check
      %p120 = pneg %p65
    $region23: #{tpu_custom_call.1} parent=1 // pred_check_branch
      %122 = sbr.rel (%p120) target = $region25
    $region24: #{tpu_custom_call.1} parent=1 // pred_region
      %v123 = vld [vmem:[#allocation2] sm:$0x1]
      %124 = vst.msk [vmem:[#allocation6] sm:$0x1] %vm118, %v123
    $region25: #{tpu_custom_call.1} parent=1 // pred_fallthru
      _
    // Predicated region
    $region26: #{tpu_custom_call.1} parent=1 // pred_check
      _
    $region27: #{tpu_custom_call.1} parent=1 // pred_check_branch
      %126 = sbr.rel (0) target = $region29
    $region28: #{tpu_custom_call.1} parent=1 // pred_region
      %s128 = ssub.s32 16, 16
      %129 = vsyncadd [#allocation5], %s128
      %s131 = sshll.u32 [#allocation6], 4
      %s132 = int_to_ptr.vmem [resolvable:$true] %s131
      %134 = dma.vmem_to_hbm [thread:$0]  %s132, 16, %s3, [#allocation5]
    $region29: #{tpu_custom_call.1} parent=1 // pred_fallthru
      _
    // Predicated region
    $region30: #{tpu_custom_call.1} parent=1 // pred_check
      _
    $region31: #{tpu_custom_call.1} parent=1 // pred_check_branch
      %136 = sbr.rel (0) target = $region33
    $region32: #{tpu_custom_call.1} parent=1 // pred_region
      %137 = dma.done [#allocation5], 16
    $region33: #{tpu_custom_call.1} parent=1 // pred_fallthru
      _
    %138 = vsyncpa [#allocation4], 1
    %139 = vsyncpa [#allocation5], 1

</llo_original>
